<compile_context>
chip_gen: v7x
topology: tpu7x:2x2x1
jax: 0.10.0
libtpu: 0.0.40
codegen_flags: <defaults>
</compile_context>

<pallas_src>
import jax
import jax.numpy as jnp
from jax.experimental import pallas as pl
from jax.experimental.pallas import tpu as pltpu


def _make_fused_detect_kernel(nl):
    """Build the fused kernel over grid=(nl,): one grid step per layer."""

    def kernel(*refs):
        x_refs = refs[0 * nl:1 * nl]   # each (N, Cin_l, HW_l)
        w_refs = refs[1 * nl:2 * nl]   # each (Cout, Cin_l)
        b_refs = refs[2 * nl:3 * nl]   # each (Cout, 1)
        o_refs = refs[3 * nl:4 * nl]   # each (N, Cout, HW_l)

        layer = pl.program_id(0)

        for l in range(nl):
            def run_layer(x_ref=x_refs[l], w_ref=w_refs[l],
                          b_ref=b_refs[l], o_ref=o_refs[l]):
                # bf16 operands for the MXU; f32 accumulate + f32 epilogue.
                wb = w_ref[...].astype(jnp.bfloat16)           # (Cout, Cin)
                bias = b_ref[...]                              # (Cout, 1), f32
                n_batch = x_ref.shape[0]
                for n in range(n_batch):                       # small static batch
                    xb = x_ref[n].astype(jnp.bfloat16)         # (Cin, HW)
                    acc = jnp.dot(wb, xb,
                                  preferred_element_type=jnp.float32)
                    z = acc + bias                             # (Cout, HW) f32
                    # sigmoid on the EUP: exp + approx reciprocal.
                    y = pl.reciprocal(1.0 + jnp.exp(-z), approx=True)
                    o_ref[n] = y.astype(o_ref.dtype)

            pl.when(layer == l)(run_layer)

    return kernel


def detect_v5_forward(xs, weights, biases):
    """Pallas implementation of DetectV5.forward: list-in, list-out (NCHW)."""
    nl = len(xs)
    assert len(weights) == nl and len(biases) == nl

    # Free (contiguous) reshapes only -- no NCHW<->NHWC transposes.
    x2 = [x.reshape(x.shape[0], x.shape[1], x.shape[2] * x.shape[3]) for x in xs]
    w2 = [w.reshape(w.shape[0], w.shape[1]) for w in weights]        # (Cout, Cin)
    b2 = [b.reshape(b.shape[0], 1) for b in biases]                  # (Cout, 1)

    out_shapes = tuple(
        jax.ShapeDtypeStruct((x.shape[0], w.shape[0], x.shape[2]), x.dtype)
        for x, w in zip(x2, w2))

    def _full_spec(shape):
        ndim = len(shape)

        def idx(l):
            return (0,) * ndim          # whole array = one block, constant index

        return pl.BlockSpec(shape, idx)

    in_specs = [_full_spec(a.shape) for a in (*x2, *w2, *b2)]
    out_specs = tuple(_full_spec(s.shape) for s in out_shapes)

    outs = pl.pallas_call(
        _make_fused_detect_kernel(nl),
        out_shape=out_shapes,
        grid_spec=pltpu.PrefetchScalarGridSpec(
            num_scalar_prefetch=0,
            grid=(nl,),
            in_specs=in_specs,
            out_specs=out_specs,
        ),
        # The layer axis must be sequential ("arbitrary"): each grid step
        # writes a different output array, and a core that never computed a
        # layer must not flush that layer's stale resident block.  At
        # production sizes the (added) H*W-tile axis would be "parallel" so
        # it shards across v7x's two TensorCores.
        compiler_params=pltpu.CompilerParams(
            dimension_semantics=("arbitrary",)),
    )(*x2, *w2, *b2)

    # (N, Cout, H*W) -> (N, Cout, H, W): free reshape, already NCHW.
    return [
        o.reshape(o.shape[0], o.shape[1], x.shape[2], x.shape[3])
        for o, x in zip(outs, xs)
    ]


def _reference_forward(xs, weights, biases):
    """Pure-JAX f32 reference (1x1 conv + bias + sigmoid, NCHW)."""
    outs = []
    for x, w, b in zip(xs, weights, biases):
        cout, cin = w.shape[0], w.shape[1]
        y = jnp.einsum('oc,nchw->nohw', w.reshape(cout, cin), x)
        y = y + b[None, :, None, None]
        outs.append(jax.nn.sigmoid(y))
    return outs


if __name__ == "__main__":
    # DetectV5-consistent small config:
    #   nc = 3 classes -> no = nc + 5 = 8;  na = 3 anchors -> Cout = na*no = 24
    #   nl = 3 layers, ch = [16, 32, 64], spatial 16/8/4 (strides 8/16/32), batch = 2
    nc, na = 3, 3
    no = nc + 5
    cout = na * no
    batch = 2
    chans = [16, 32, 64]
    spatials = [16, 8, 4]

    key = jax.random.PRNGKey(0)
    xs, weights, biases = [], [], []
    for c, s in zip(chans, spatials):
        key, kx, kw, kb = jax.random.split(key, 4)
        xs.append(jax.random.normal(kx, (batch, c, s, s), dtype=jnp.float32))
        weights.append(
            0.1 * jax.random.normal(kw, (cout, c, 1, 1), dtype=jnp.float32))
        biases.append(
            0.1 * jax.random.normal(kb, (cout,), dtype=jnp.float32))

    outs = detect_v5_forward(xs, weights, biases)
    outs = [jax.block_until_ready(o) for o in outs]

    refs = _reference_forward(xs, weights, biases)
    for o, r, s in zip(outs, refs, spatials):
        assert o.shape == (batch, cout, s, s), o.shape
        # bf16 MXU operands + approx reciprocal => modest tolerance vs f32 ref.
        assert jnp.allclose(o, r, atol=2e-2, rtol=0.0), "mismatch vs reference"

    print("KERNEL_OK")
</pallas_src>

<mosaic_0001>
module attributes {stable_mosaic.version = 11 : i64} {
  func.func @kernel(%arg0: i32, %arg1: memref<2x16x256xf32, #tpu.memory_space<vmem>>, %arg2: memref<2x32x64xf32, #tpu.memory_space<vmem>>, %arg3: memref<2x64x16xf32, #tpu.memory_space<vmem>>, %arg4: memref<24x16xf32, #tpu.memory_space<vmem>>, %arg5: memref<24x32xf32, #tpu.memory_space<vmem>>, %arg6: memref<24x64xf32, #tpu.memory_space<vmem>>, %arg7: memref<24x1xf32, #tpu.memory_space<vmem>>, %arg8: memref<24x1xf32, #tpu.memory_space<vmem>>, %arg9: memref<24x1xf32, #tpu.memory_space<vmem>>, %arg10: memref<2x24x256xf32, #tpu.memory_space<vmem>>, %arg11: memref<2x24x64xf32, #tpu.memory_space<vmem>>, %arg12: memref<2x24x16xf32, #tpu.memory_space<vmem>>) attributes {dimension_semantics = [#tpu.dimension_semantics<arbitrary>], iteration_bounds = array<i64: 3>, scalar_prefetch = 0 : i64, scratch_operands = 0 : i64, tpu.core_type = #tpu.core_type<tc>, window_params = [{pipeline_mode = #tpu.pipeline_mode<synchronous>, transform_indices = @transform_0, window_bounds = array<i64: 2, 16, 256>}, {pipeline_mode = #tpu.pipeline_mode<synchronous>, transform_indices = @transform_1, window_bounds = array<i64: 2, 32, 64>}, {pipeline_mode = #tpu.pipeline_mode<synchronous>, transform_indices = @transform_2, window_bounds = array<i64: 2, 64, 16>}, {pipeline_mode = #tpu.pipeline_mode<synchronous>, transform_indices = @transform_3, window_bounds = array<i64: 24, 16>}, {pipeline_mode = #tpu.pipeline_mode<synchronous>, transform_indices = @transform_4, window_bounds = array<i64: 24, 32>}, {pipeline_mode = #tpu.pipeline_mode<synchronous>, transform_indices = @transform_5, window_bounds = array<i64: 24, 64>}, {pipeline_mode = #tpu.pipeline_mode<synchronous>, transform_indices = @transform_6, window_bounds = array<i64: 24, 1>}, {pipeline_mode = #tpu.pipeline_mode<synchronous>, transform_indices = @transform_7, window_bounds = array<i64: 24, 1>}, {pipeline_mode = #tpu.pipeline_mode<synchronous>, transform_indices = @transform_8, window_bounds = array<i64: 24, 1>}, {pipeline_mode = #tpu.pipeline_mode<synchronous>, transform_indices = @transform_9, window_bounds = array<i64: 2, 24, 256>}, {pipeline_mode = #tpu.pipeline_mode<synchronous>, transform_indices = @transform_10, window_bounds = array<i64: 2, 24, 64>}, {pipeline_mode = #tpu.pipeline_mode<synchronous>, transform_indices = @transform_11, window_bounds = array<i64: 2, 24, 16>}]} {
    %c0_i32 = arith.constant 0 : i32
    %0 = arith.cmpi eq, %arg0, %c0_i32 : i32
    %1 = arith.extui %0 : i1 to i32
    %c0_i32_0 = arith.constant 0 : i32
    %2 = arith.cmpi ne, %1, %c0_i32_0 : i32
    scf.if %2 {
      %c0 = arith.constant 0 : index
      %c0_3 = arith.constant 0 : index
      %9 = vector.load %arg4[%c0, %c0_3] : memref<24x16xf32, #tpu.memory_space<vmem>>, vector<24x16xf32>
      %10 = arith.truncf %9 : vector<24x16xf32> to vector<24x16xbf16>
      %c0_4 = arith.constant 0 : index
      %c0_5 = arith.constant 0 : index
      %11 = vector.load %arg7[%c0_4, %c0_5] : memref<24x1xf32, #tpu.memory_space<vmem>>, vector<24x1xf32>
      %c0_6 = arith.constant 0 : index
      %c0_7 = arith.constant 0 : index
      %c0_8 = arith.constant 0 : index
      %12 = vector.load %arg1[%c0_6, %c0_7, %c0_8] : memref<2x16x256xf32, #tpu.memory_space<vmem>>, vector<1x16x256xf32>
      %13 = vector.shape_cast %12 : vector<1x16x256xf32> to vector<16x256xf32>
      %14 = arith.truncf %13 : vector<16x256xf32> to vector<16x256xbf16>
      %cst = arith.constant dense<0.000000e+00> : vector<24x256xf32>
      %15 = tpu.matmul %10, %14, %cst {dimension_numbers = #tpu.dot_dimension_numbers<[1], [0], [0], [1], [0, 0, 1, 1], [], []>} : vector<24x16xbf16>, vector<16x256xbf16>, vector<24x256xf32> -> vector<24x256xf32>
      %16 = vector.broadcast %11 : vector<24x1xf32> to vector<24x256xf32>
      %17 = arith.addf %15, %16 : vector<24x256xf32>
      %cst_9 = arith.constant 0.000000e+00 : f32
      %18 = vector.broadcast %cst_9 : f32 to vector<24x256xf32>
      %19 = arith.subf %18, %17 : vector<24x256xf32>
      %20 = math.exp %19 : vector<24x256xf32>
      %cst_10 = arith.constant 1.000000e+00 : f32
      %21 = vector.broadcast %cst_10 : f32 to vector<24x256xf32>
      %22 = arith.addf %21, %20 : vector<24x256xf32>
      %23 = tpu.reciprocal %22 {approx = true} : vector<24x256xf32> -> vector<24x256xf32>
      %c0_11 = arith.constant 0 : index
      %c0_12 = arith.constant 0 : index
      %c0_13 = arith.constant 0 : index
      %24 = vector.load %arg10[%c0_11, %c0_12, %c0_13] : memref<2x24x256xf32, #tpu.memory_space<vmem>>, vector<1x24x256xf32>
      %25 = vector.shape_cast %24 : vector<1x24x256xf32> to vector<24x256xf32>
      %26 = vector.shape_cast %23 : vector<24x256xf32> to vector<1x24x256xf32>
      tpu.vector_store %arg10[%c0_11, %c0_12, %c0_13], %26 {strides = array<i32>} : memref<2x24x256xf32, #tpu.memory_space<vmem>>, vector<1x24x256xf32>,
      %c1 = arith.constant 1 : index
      %c0_14 = arith.constant 0 : index
      %c0_15 = arith.constant 0 : index
      %27 = vector.load %arg1[%c1, %c0_14, %c0_15] : memref<2x16x256xf32, #tpu.memory_space<vmem>>, vector<1x16x256xf32>
      %28 = vector.shape_cast %27 : vector<1x16x256xf32> to vector<16x256xf32>
      %29 = arith.truncf %28 : vector<16x256xf32> to vector<16x256xbf16>
      %cst_16 = arith.constant dense<0.000000e+00> : vector<24x256xf32>
      %30 = tpu.matmul %10, %29, %cst_16 {dimension_numbers = #tpu.dot_dimension_numbers<[1], [0], [0], [1], [0, 0, 1, 1], [], []>} : vector<24x16xbf16>, vector<16x256xbf16>, vector<24x256xf32> -> vector<24x256xf32>
      %31 = vector.broadcast %11 : vector<24x1xf32> to vector<24x256xf32>
      %32 = arith.addf %30, %31 : vector<24x256xf32>
      %cst_17 = arith.constant 0.000000e+00 : f32
      %33 = vector.broadcast %cst_17 : f32 to vector<24x256xf32>
      %34 = arith.subf %33, %32 : vector<24x256xf32>
      %35 = math.exp %34 : vector<24x256xf32>
      %cst_18 = arith.constant 1.000000e+00 : f32
      %36 = vector.broadcast %cst_18 : f32 to vector<24x256xf32>
      %37 = arith.addf %36, %35 : vector<24x256xf32>
      %38 = tpu.reciprocal %37 {approx = true} : vector<24x256xf32> -> vector<24x256xf32>
      %c1_19 = arith.constant 1 : index
      %c0_20 = arith.constant 0 : index
      %c0_21 = arith.constant 0 : index
      %39 = vector.load %arg10[%c1_19, %c0_20, %c0_21] : memref<2x24x256xf32, #tpu.memory_space<vmem>>, vector<1x24x256xf32>
      %40 = vector.shape_cast %39 : vector<1x24x256xf32> to vector<24x256xf32>
      %41 = vector.shape_cast %38 : vector<24x256xf32> to vector<1x24x256xf32>
      tpu.vector_store %arg10[%c1_19, %c0_20, %c0_21], %41 {strides = array<i32>} : memref<2x24x256xf32, #tpu.memory_space<vmem>>, vector<1x24x256xf32>,
    } else {
    }
    %c1_i32 = arith.constant 1 : i32
    %3 = arith.cmpi eq, %arg0, %c1_i32 : i32
    %4 = arith.extui %3 : i1 to i32
    %c0_i32_1 = arith.constant 0 : i32
    %5 = arith.cmpi ne, %4, %c0_i32_1 : i32
    scf.if %5 {
      %c0 = arith.constant 0 : index
      %c0_3 = arith.constant 0 : index
      %9 = vector.load %arg5[%c0, %c0_3] : memref<24x32xf32, #tpu.memory_space<vmem>>, vector<24x32xf32>
      %10 = arith.truncf %9 : vector<24x32xf32> to vector<24x32xbf16>
      %c0_4 = arith.constant 0 : index
      %c0_5 = arith.constant 0 : index
      %11 = vector.load %arg8[%c0_4, %c0_5] : memref<24x1xf32, #tpu.memory_space<vmem>>, vector<24x1xf32>
      %c0_6 = arith.constant 0 : index
      %c0_7 = arith.constant 0 : index
      %c0_8 = arith.constant 0 : index
      %12 = vector.load %arg2[%c0_6, %c0_7, %c0_8] : memref<2x32x64xf32, #tpu.memory_space<vmem>>, vector<1x32x64xf32>
      %13 = vector.shape_cast %12 : vector<1x32x64xf32> to vector<32x64xf32>
      %14 = arith.truncf %13 : vector<32x64xf32> to vector<32x64xbf16>
      %cst = arith.constant dense<0.000000e+00> : vector<24x64xf32>
      %15 = tpu.matmul %10, %14, %cst {dimension_numbers = #tpu.dot_dimension_numbers<[1], [0], [0], [1], [0, 0, 1, 1], [], []>} : vector<24x32xbf16>, vector<32x64xbf16>, vector<24x64xf32> -> vector<24x64xf32>
      %16 = vector.broadcast %11 : vector<24x1xf32> to vector<24x64xf32>
      %17 = arith.addf %15, %16 : vector<24x64xf32>
      %cst_9 = arith.constant 0.000000e+00 : f32
      %18 = vector.broadcast %cst_9 : f32 to vector<24x64xf32>
      %19 = arith.subf %18, %17 : vector<24x64xf32>
      %20 = math.exp %19 : vector<24x64xf32>
      %cst_10 = arith.constant 1.000000e+00 : f32
      %21 = vector.broadcast %cst_10 : f32 to vector<24x64xf32>
      %22 = arith.addf %21, %20 : vector<24x64xf32>
      %23 = tpu.reciprocal %22 {approx = true} : vector<24x64xf32> -> vector<24x64xf32>
      %c0_11 = arith.constant 0 : index
      %c0_12 = arith.constant 0 : index
      %c0_13 = arith.constant 0 : index
      %24 = vector.load %arg11[%c0_11, %c0_12, %c0_13] : memref<2x24x64xf32, #tpu.memory_space<vmem>>, vector<1x24x64xf32>
      %25 = vector.shape_cast %24 : vector<1x24x64xf32> to vector<24x64xf32>
      %26 = vector.shape_cast %23 : vector<24x64xf32> to vector<1x24x64xf32>
      tpu.vector_store %arg11[%c0_11, %c0_12, %c0_13], %26 {strides = array<i32>} : memref<2x24x64xf32, #tpu.memory_space<vmem>>, vector<1x24x64xf32>,
      %c1 = arith.constant 1 : index
      %c0_14 = arith.constant 0 : index
      %c0_15 = arith.constant 0 : index
      %27 = vector.load %arg2[%c1, %c0_14, %c0_15] : memref<2x32x64xf32, #tpu.memory_space<vmem>>, vector<1x32x64xf32>
      %28 = vector.shape_cast %27 : vector<1x32x64xf32> to vector<32x64xf32>
      %29 = arith.truncf %28 : vector<32x64xf32> to vector<32x64xbf16>
      %cst_16 = arith.constant dense<0.000000e+00> : vector<24x64xf32>
      %30 = tpu.matmul %10, %29, %cst_16 {dimension_numbers = #tpu.dot_dimension_numbers<[1], [0], [0], [1], [0, 0, 1, 1], [], []>} : vector<24x32xbf16>, vector<32x64xbf16>, vector<24x64xf32> -> vector<24x64xf32>
      %31 = vector.broadcast %11 : vector<24x1xf32> to vector<24x64xf32>
      %32 = arith.addf %30, %31 : vector<24x64xf32>
      %cst_17 = arith.constant 0.000000e+00 : f32
      %33 = vector.broadcast %cst_17 : f32 to vector<24x64xf32>
      %34 = arith.subf %33, %32 : vector<24x64xf32>
      %35 = math.exp %34 : vector<24x64xf32>
      %cst_18 = arith.constant 1.000000e+00 : f32
      %36 = vector.broadcast %cst_18 : f32 to vector<24x64xf32>
      %37 = arith.addf %36, %35 : vector<24x64xf32>
      %38 = tpu.reciprocal %37 {approx = true} : vector<24x64xf32> -> vector<24x64xf32>
      %c1_19 = arith.constant 1 : index
      %c0_20 = arith.constant 0 : index
      %c0_21 = arith.constant 0 : index
      %39 = vector.load %arg11[%c1_19, %c0_20, %c0_21] : memref<2x24x64xf32, #tpu.memory_space<vmem>>, vector<1x24x64xf32>
      %40 = vector.shape_cast %39 : vector<1x24x64xf32> to vector<24x64xf32>
      %41 = vector.shape_cast %38 : vector<24x64xf32> to vector<1x24x64xf32>
      tpu.vector_store %arg11[%c1_19, %c0_20, %c0_21], %41 {strides = array<i32>} : memref<2x24x64xf32, #tpu.memory_space<vmem>>, vector<1x24x64xf32>,
    } else {
    }
    %c2_i32 = arith.constant 2 : i32
    %6 = arith.cmpi eq, %arg0, %c2_i32 : i32
    %7 = arith.extui %6 : i1 to i32
    %c0_i32_2 = arith.constant 0 : i32
    %8 = arith.cmpi ne, %7, %c0_i32_2 : i32
    scf.if %8 {
      %c0 = arith.constant 0 : index
      %c0_3 = arith.constant 0 : index
      %9 = vector.load %arg6[%c0, %c0_3] : memref<24x64xf32, #tpu.memory_space<vmem>>, vector<24x64xf32>
      %10 = arith.truncf %9 : vector<24x64xf32> to vector<24x64xbf16>
      %c0_4 = arith.constant 0 : index
      %c0_5 = arith.constant 0 : index
      %11 = vector.load %arg9[%c0_4, %c0_5] : memref<24x1xf32, #tpu.memory_space<vmem>>, vector<24x1xf32>
      %c0_6 = arith.constant 0 : index
      %c0_7 = arith.constant 0 : index
      %c0_8 = arith.constant 0 : index
      %12 = vector.load %arg3[%c0_6, %c0_7, %c0_8] : memref<2x64x16xf32, #tpu.memory_space<vmem>>, vector<1x64x16xf32>
      %13 = vector.shape_cast %12 : vector<1x64x16xf32> to vector<64x16xf32>
      %14 = arith.truncf %13 : vector<64x16xf32> to vector<64x16xbf16>
      %cst = arith.constant dense<0.000000e+00> : vector<24x16xf32>
      %15 = tpu.matmul %10, %14, %cst {dimension_numbers = #tpu.dot_dimension_numbers<[1], [0], [0], [1], [0, 0, 1, 1], [], []>} : vector<24x64xbf16>, vector<64x16xbf16>, vector<24x16xf32> -> vector<24x16xf32>
      %16 = vector.broadcast %11 : vector<24x1xf32> to vector<24x16xf32>
      %17 = arith.addf %15, %16 : vector<24x16xf32>
      %cst_9 = arith.constant 0.000000e+00 : f32
      %18 = vector.broadcast %cst_9 : f32 to vector<24x16xf32>
      %19 = arith.subf %18, %17 : vector<24x16xf32>
      %20 = math.exp %19 : vector<24x16xf32>
      %cst_10 = arith.constant 1.000000e+00 : f32
      %21 = vector.broadcast %cst_10 : f32 to vector<24x16xf32>
      %22 = arith.addf %21, %20 : vector<24x16xf32>
      %23 = tpu.reciprocal %22 {approx = true} : vector<24x16xf32> -> vector<24x16xf32>
      %c0_11 = arith.constant 0 : index
      %c0_12 = arith.constant 0 : index
      %c0_13 = arith.constant 0 : index
      %24 = vector.load %arg12[%c0_11, %c0_12, %c0_13] : memref<2x24x16xf32, #tpu.memory_space<vmem>>, vector<1x24x16xf32>
      %25 = vector.shape_cast %24 : vector<1x24x16xf32> to vector<24x16xf32>
      %26 = vector.shape_cast %23 : vector<24x16xf32> to vector<1x24x16xf32>
      tpu.vector_store %arg12[%c0_11, %c0_12, %c0_13], %26 {strides = array<i32>} : memref<2x24x16xf32, #tpu.memory_space<vmem>>, vector<1x24x16xf32>,
      %c1 = arith.constant 1 : index
      %c0_14 = arith.constant 0 : index
      %c0_15 = arith.constant 0 : index
      %27 = vector.load %arg3[%c1, %c0_14, %c0_15] : memref<2x64x16xf32, #tpu.memory_space<vmem>>, vector<1x64x16xf32>
      %28 = vector.shape_cast %27 : vector<1x64x16xf32> to vector<64x16xf32>
      %29 = arith.truncf %28 : vector<64x16xf32> to vector<64x16xbf16>
      %cst_16 = arith.constant dense<0.000000e+00> : vector<24x16xf32>
      %30 = tpu.matmul %10, %29, %cst_16 {dimension_numbers = #tpu.dot_dimension_numbers<[1], [0], [0], [1], [0, 0, 1, 1], [], []>} : vector<24x64xbf16>, vector<64x16xbf16>, vector<24x16xf32> -> vector<24x16xf32>
      %31 = vector.broadcast %11 : vector<24x1xf32> to vector<24x16xf32>
      %32 = arith.addf %30, %31 : vector<24x16xf32>
      %cst_17 = arith.constant 0.000000e+00 : f32
      %33 = vector.broadcast %cst_17 : f32 to vector<24x16xf32>
      %34 = arith.subf %33, %32 : vector<24x16xf32>
      %35 = math.exp %34 : vector<24x16xf32>
      %cst_18 = arith.constant 1.000000e+00 : f32
      %36 = vector.broadcast %cst_18 : f32 to vector<24x16xf32>
      %37 = arith.addf %36, %35 : vector<24x16xf32>
      %38 = tpu.reciprocal %37 {approx = true} : vector<24x16xf32> -> vector<24x16xf32>
      %c1_19 = arith.constant 1 : index
      %c0_20 = arith.constant 0 : index
      %c0_21 = arith.constant 0 : index
      %39 = vector.load %arg12[%c1_19, %c0_20, %c0_21] : memref<2x24x16xf32, #tpu.memory_space<vmem>>, vector<1x24x16xf32>
      %40 = vector.shape_cast %39 : vector<1x24x16xf32> to vector<24x16xf32>
      %41 = vector.shape_cast %38 : vector<24x16xf32> to vector<1x24x16xf32>
      tpu.vector_store %arg12[%c1_19, %c0_20, %c0_21], %41 {strides = array<i32>} : memref<2x24x16xf32, #tpu.memory_space<vmem>>, vector<1x24x16xf32>,
    } else {
    }
    return
  }
  func.func @transform_0(%arg0: i32) -> (i32, i32, i32) {
    %c0_i32 = arith.constant 0 : i32
    %c0_i32_0 = arith.constant 0 : i32
    %c0_i32_1 = arith.constant 0 : i32
    %c0_i32_2 = arith.constant 0 : i32
    return %c0_i32, %c0_i32_0, %c0_i32_1 : i32, i32, i32
  }
  func.func @transform_1(%arg0: i32) -> (i32, i32, i32) {
    %c0_i32 = arith.constant 0 : i32
    %c0_i32_0 = arith.constant 0 : i32
    %c0_i32_1 = arith.constant 0 : i32
    %c0_i32_2 = arith.constant 0 : i32
    return %c0_i32, %c0_i32_0, %c0_i32_1 : i32, i32, i32
  }
  func.func @transform_2(%arg0: i32) -> (i32, i32, i32) {
    %c0_i32 = arith.constant 0 : i32
    %c0_i32_0 = arith.constant 0 : i32
    %c0_i32_1 = arith.constant 0 : i32
    %c0_i32_2 = arith.constant 0 : i32
    return %c0_i32, %c0_i32_0, %c0_i32_1 : i32, i32, i32
  }
  func.func @transform_3(%arg0: i32) -> (i32, i32) {
    %c0_i32 = arith.constant 0 : i32
    %c0_i32_0 = arith.constant 0 : i32
    %c0_i32_1 = arith.constant 0 : i32
    return %c0_i32, %c0_i32_0 : i32, i32
  }
  func.func @transform_4(%arg0: i32) -> (i32, i32) {
    %c0_i32 = arith.constant 0 : i32
    %c0_i32_0 = arith.constant 0 : i32
    %c0_i32_1 = arith.constant 0 : i32
    return %c0_i32, %c0_i32_0 : i32, i32
  }
  func.func @transform_5(%arg0: i32) -> (i32, i32) {
    %c0_i32 = arith.constant 0 : i32
    %c0_i32_0 = arith.constant 0 : i32
    %c0_i32_1 = arith.constant 0 : i32
    return %c0_i32, %c0_i32_0 : i32, i32
  }
  func.func @transform_6(%arg0: i32) -> (i32, i32) {
    %c0_i32 = arith.constant 0 : i32
    %c0_i32_0 = arith.constant 0 : i32
    %c0_i32_1 = arith.constant 0 : i32
    return %c0_i32, %c0_i32_0 : i32, i32
  }
  func.func @transform_7(%arg0: i32) -> (i32, i32) {
    %c0_i32 = arith.constant 0 : i32
    %c0_i32_0 = arith.constant 0 : i32
    %c0_i32_1 = arith.constant 0 : i32
    return %c0_i32, %c0_i32_0 : i32, i32
  }
  func.func @transform_8(%arg0: i32) -> (i32, i32) {
    %c0_i32 = arith.constant 0 : i32
    %c0_i32_0 = arith.constant 0 : i32
    %c0_i32_1 = arith.constant 0 : i32
    return %c0_i32, %c0_i32_0 : i32, i32
  }
  func.func @transform_9(%arg0: i32) -> (i32, i32, i32) {
    %c0_i32 = arith.constant 0 : i32
    %c0_i32_0 = arith.constant 0 : i32
    %c0_i32_1 = arith.constant 0 : i32
    %c0_i32_2 = arith.constant 0 : i32
    return %c0_i32, %c0_i32_0, %c0_i32_1 : i32, i32, i32
  }
  func.func @transform_10(%arg0: i32) -> (i32, i32, i32) {
    %c0_i32 = arith.constant 0 : i32
    %c0_i32_0 = arith.constant 0 : i32
    %c0_i32_1 = arith.constant 0 : i32
    %c0_i32_2 = arith.constant 0 : i32
    return %c0_i32, %c0_i32_0, %c0_i32_1 : i32, i32, i32
  }
  func.func @transform_11(%arg0: i32) -> (i32, i32, i32) {
    %c0_i32 = arith.constant 0 : i32
    %c0_i32_0 = arith.constant 0 : i32
    %c0_i32_1 = arith.constant 0 : i32
    %c0_i32_2 = arith.constant 0 : i32
    return %c0_i32, %c0_i32_0, %c0_i32_1 : i32, i32, i32
  }
}

</mosaic_0001>

<llo_original>
// kernel: tpu_custom_call.1
$region0: #{tpu_custom_call.1}
  #allocation0 [shape = 'u32[]', space=smem, size = 0x4, offset = 0x4, fixed_abs, tag = 'smem constant byte address 0x4 - core index']
  #allocation1 [shape = 'u32[144,128]{1,0:T(1,128)}', space=vmem, size = 0x12000, scoped, tag = 'internal scratch']
  %s0 = inlined_call_operand.vmem [shape: f32[2,16,256], index: 0, kind: input, shape index: {}]
  %s1 = inlined_call_operand.vmem [shape: f32[2,32,64], index: 1, kind: input, shape index: {}]
  %s2 = inlined_call_operand.vmem [shape: f32[2,64,16], index: 2, kind: input, shape index: {}]
  %s3 = inlined_call_operand.vmem [shape: f32[24,16], index: 3, kind: input, shape index: {}]
  %s4 = inlined_call_operand.vmem [shape: f32[24,32], index: 4, kind: input, shape index: {}]
  %s5 = inlined_call_operand.vmem [shape: f32[24,64], index: 5, kind: input, shape index: {}]
  %s6 = inlined_call_operand.vmem [shape: f32[24,1], index: 6, kind: input, shape index: {}]
  %s7 = inlined_call_operand.vmem [shape: f32[24,1], index: 7, kind: input, shape index: {}]
  %s8 = inlined_call_operand.vmem [shape: f32[24,1], index: 8, kind: input, shape index: {}]
  %s9 = inlined_call_operand.hbm [shape: f32[2,24,256], index: 9, kind: output, shape index: {0}]
  %s10 = inlined_call_operand.hbm [shape: f32[2,24,64], index: 10, kind: output, shape index: {1}]
  %s11 = inlined_call_operand.vmem [shape: f32[2,24,16], index: 11, kind: output, shape index: {2}]
  %12 = xla_tuple %s9, %s10, %s11
  %s13 = sld [smem:[#allocation0]]
  $region97: #{tpu_custom_call.1} parent=0
    _
  %s15 = ssub.s32 1, %s13
  %s16 = scalar_select 0, %s15, %s13
  $region1: #{tpu_custom_call.1} parent=0
    #allocation2 [shape = 'u8[49152]{0}', space=vmem, size = 0xc000, scoped, tag = 'output window, operand 0, single buffered']
    #allocation3 [shape = 's32[2]{0}', space=sflag, size = 0x8, scoped, tag = 'scoped memory for tpu_custom_call.1']
    #allocation4 [shape = 'u8[24576]{0}', space=vmem, size = 0x6000, scoped, tag = 'output window, operand 1, single buffered']
    #allocation5 [shape = 's32[1]{0}', space=sflag, size = 0x4, scoped, tag = 'scoped memory for tpu_custom_call.1']
    %17 = vsyncpa [#allocation3], 0
    %18 = vsyncpa [#allocation5], 0
    loop: start=0, step=1, limit=5
    $region2: #{tpu_custom_call.1} parent=1 // loop_pre_header
      _
    $region3: #{tpu_custom_call.1} parent=1 // loop_header
      %s20 = sphi 0, %s24
      %p21 = scmp.ge.s32.totalorder %s20, 5
      %s28 = sphi 0, %s28
      %s30 = sphi 0, %s28
      %s31 = sphi 0, %s30
      %s45 = sphi 0, %s31
      %s49 = sphi 0, %s49
      %s51 = sphi 0, %s49
      %s52 = sphi 0, %s51
      %s66 = sphi 0, %s52
      %s70 = sphi 0, %s70
      %s72 = sphi 0, %s70
      %s73 = sphi 0, %s72
      %s87 = sphi 0, %s73
      %s91 = sphi 0, %s91
      %s93 = sphi 0, %s91
      %s94 = sphi 0, %s93
      %s108 = sphi 0, %s94
      %s112 = sphi 0, %s112
      %s114 = sphi 0, %s112
      %s115 = sphi 0, %s114
      %s129 = sphi 0, %s115
      %s133 = sphi 0, %s133
      %s135 = sphi 0, %s133
      %s136 = sphi 0, %s135
      %s150 = sphi 0, %s136
      %s154 = sphi 0, %s154
      %s156 = sphi 0, %s154
      %s157 = sphi 0, %s156
      %s171 = sphi 0, %s157
      %s175 = sphi 0, %s175
      %s177 = sphi 0, %s175
      %s178 = sphi 0, %s177
      %s192 = sphi 0, %s178
      %s196 = sphi 0, %s196
      %s198 = sphi 0, %s196
      %s199 = sphi 0, %s198
      %s213 = sphi 0, %s199
      %s217 = sphi 0, %s217
      %s219 = sphi 0, %s217
      %s220 = sphi 0, %s219
      %s234 = sphi 0, %s220
      %s238 = sphi 0, %s238
      %s240 = sphi 0, %s238
      %s241 = sphi 0, %s240
      %s255 = sphi 0, %s241
      %s259 = sphi 0, %s259
      %s261 = sphi 0, %s259
      %s262 = sphi 0, %s261
      %s276 = sphi 0, %s262
    $region4: #{tpu_custom_call.1} parent=1 // loop_header_branch
      %23 = sbr.rel (%p21) target = $region8
    $region5: #{tpu_custom_call.1} parent=1 // loop_body
      %s25 = ssub.s32 %s20, 1
      %s26 = ssub.s32 %s20, 2
      %s27 = sadd.s32 %s20, 1
      %s29 = sadd.s32 %s28, 1
      %p32 = scmp.eq.s32.totalorder %s20, 2
      %p33 = scmp.ne.s32.totalorder %s28, %s30
      %p34 = scmp.eq.s32.totalorder %s20, 0
      %p35 = por %p33, %p34
      %p36 = scmp.ne.s32.totalorder %s28, %s30
      %p37 = scmp.eq.s32.totalorder %s25, 2
      %p38 = por %p36, %p37
      %p39 = scmp.ne.s32.totalorder %s30, %s31
      %p40 = scmp.eq.s32.totalorder %s25, 0
      %p41 = por %p39, %p40
      %p42 = scmp.ne.s32.totalorder %s30, %s31
      %p43 = scmp.eq.s32.totalorder %s26, 2
      %p44 = por %p42, %p43
      %p46 = scmp.ne.s32.totalorder %s31, %s45
      %p47 = scmp.eq.s32.totalorder %s26, 0
      %p48 = por %p46, %p47
      %s50 = sadd.s32 %s49, 1
      %p53 = scmp.eq.s32.totalorder %s20, 2
      %p54 = scmp.ne.s32.totalorder %s49, %s51
      %p55 = scmp.eq.s32.totalorder %s20, 0
      %p56 = por %p54, %p55
      %p57 = scmp.ne.s32.totalorder %s49, %s51
      %p58 = scmp.eq.s32.totalorder %s25, 2
      %p59 = por %p57, %p58
      %p60 = scmp.ne.s32.totalorder %s51, %s52
      %p61 = scmp.eq.s32.totalorder %s25, 0
      %p62 = por %p60, %p61
      %p63 = scmp.ne.s32.totalorder %s51, %s52
      %p64 = scmp.eq.s32.totalorder %s26, 2
      %p65 = por %p63, %p64
      %p67 = scmp.ne.s32.totalorder %s52, %s66
      %p68 = scmp.eq.s32.totalorder %s26, 0
      %p69 = por %p67, %p68
      %s71 = sadd.s32 %s70, 1
      %p74 = scmp.eq.s32.totalorder %s20, 2
      %p75 = scmp.ne.s32.totalorder %s70, %s72
      %p76 = scmp.eq.s32.totalorder %s20, 0
      %p77 = por %p75, %p76
      %p78 = scmp.ne.s32.totalorder %s70, %s72
      %p79 = scmp.eq.s32.totalorder %s25, 2
      %p80 = por %p78, %p79
      %p81 = scmp.ne.s32.totalorder %s72, %s73
      %p82 = scmp.eq.s32.totalorder %s25, 0
      %p83 = por %p81, %p82
      %p84 = scmp.ne.s32.totalorder %s72, %s73
      %p85 = scmp.eq.s32.totalorder %s26, 2
      %p86 = por %p84, %p85
      %p88 = scmp.ne.s32.totalorder %s73, %s87
      %p89 = scmp.eq.s32.totalorder %s26, 0
      %p90 = por %p88, %p89
      %s92 = sadd.s32 %s91, 1
      %p95 = scmp.eq.s32.totalorder %s20, 2
      %p96 = scmp.ne.s32.totalorder %s91, %s93
      %p97 = scmp.eq.s32.totalorder %s20, 0
      %p98 = por %p96, %p97
      %p99 = scmp.ne.s32.totalorder %s91, %s93
      %p100 = scmp.eq.s32.totalorder %s25, 2
      %p101 = por %p99, %p100
      %p102 = scmp.ne.s32.totalorder %s93, %s94
      %p103 = scmp.eq.s32.totalorder %s25, 0
      %p104 = por %p102, %p103
      %p105 = scmp.ne.s32.totalorder %s93, %s94
      %p106 = scmp.eq.s32.totalorder %s26, 2
      %p107 = por %p105, %p106
      %p109 = scmp.ne.s32.totalorder %s94, %s108
      %p110 = scmp.eq.s32.totalorder %s26, 0
      %p111 = por %p109, %p110
      %s113 = sadd.s32 %s112, 1
      %p116 = scmp.eq.s32.totalorder %s20, 2
      %p117 = scmp.ne.s32.totalorder %s112, %s114
      %p118 = scmp.eq.s32.totalorder %s20, 0
      %p119 = por %p117, %p118
      %p120 = scmp.ne.s32.totalorder %s112, %s114
      %p121 = scmp.eq.s32.totalorder %s25, 2
      %p122 = por %p120, %p121
      %p123 = scmp.ne.s32.totalorder %s114, %s115
      %p124 = scmp.eq.s32.totalorder %s25, 0
      %p125 = por %p123, %p124
      %p126 = scmp.ne.s32.totalorder %s114, %s115
      %p127 = scmp.eq.s32.totalorder %s26, 2
      %p128 = por %p126, %p127
      %p130 = scmp.ne.s32.totalorder %s115, %s129
      %p131 = scmp.eq.s32.totalorder %s26, 0
      %p132 = por %p130, %p131
      %s134 = sadd.s32 %s133, 1
      %p137 = scmp.eq.s32.totalorder %s20, 2
      %p138 = scmp.ne.s32.totalorder %s133, %s135
      %p139 = scmp.eq.s32.totalorder %s20, 0
      %p140 = por %p138, %p139
      %p141 = scmp.ne.s32.totalorder %s133, %s135
      %p142 = scmp.eq.s32.totalorder %s25, 2
      %p143 = por %p141, %p142
      %p144 = scmp.ne.s32.totalorder %s135, %s136
      %p145 = scmp.eq.s32.totalorder %s25, 0
      %p146 = por %p144, %p145
      %p147 = scmp.ne.s32.totalorder %s135, %s136
      %p148 = scmp.eq.s32.totalorder %s26, 2
      %p149 = por %p147, %p148
      %p151 = scmp.ne.s32.totalorder %s136, %s150
      %p152 = scmp.eq.s32.totalorder %s26, 0
      %p153 = por %p151, %p152
      %s155 = sadd.s32 %s154, 1
      %p158 = scmp.eq.s32.totalorder %s20, 2
      %p159 = scmp.ne.s32.totalorder %s154, %s156
      %p160 = scmp.eq.s32.totalorder %s20, 0
      %p161 = por %p159, %p160
      %p162 = scmp.ne.s32.totalorder %s154, %s156
      %p163 = scmp.eq.s32.totalorder %s25, 2
      %p164 = por %p162, %p163
      %p165 = scmp.ne.s32.totalorder %s156, %s157
      %p166 = scmp.eq.s32.totalorder %s25, 0
      %p167 = por %p165, %p166
      %p168 = scmp.ne.s32.totalorder %s156, %s157
      %p169 = scmp.eq.s32.totalorder %s26, 2
      %p170 = por %p168, %p169
      %p172 = scmp.ne.s32.totalorder %s157, %s171
      %p173 = scmp.eq.s32.totalorder %s26, 0
      %p174 = por %p172, %p173
      %s176 = sadd.s32 %s175, 1
      %p179 = scmp.eq.s32.totalorder %s20, 2
      %p180 = scmp.ne.s32.totalorder %s175, %s177
      %p181 = scmp.eq.s32.totalorder %s20, 0
      %p182 = por %p180, %p181
      %p183 = scmp.ne.s32.totalorder %s175, %s177
      %p184 = scmp.eq.s32.totalorder %s25, 2
      %p185 = por %p183, %p184
      %p186 = scmp.ne.s32.totalorder %s177, %s178
      %p187 = scmp.eq.s32.totalorder %s25, 0
      %p188 = por %p186, %p187
      %p189 = scmp.ne.s32.totalorder %s177, %s178
      %p190 = scmp.eq.s32.totalorder %s26, 2
      %p191 = por %p189, %p190
      %p193 = scmp.ne.s32.totalorder %s178, %s192
      %p194 = scmp.eq.s32.totalorder %s26, 0
      %p195 = por %p193, %p194
      %s197 = sadd.s32 %s196, 1
      %p200 = scmp.eq.s32.totalorder %s20, 2
      %p201 = scmp.ne.s32.totalorder %s196, %s198
      %p202 = scmp.eq.s32.totalorder %s20, 0
      %p203 = por %p201, %p202
      %p204 = scmp.ne.s32.totalorder %s196, %s198
      %p205 = scmp.eq.s32.totalorder %s25, 2
      %p206 = por %p204, %p205
      %p207 = scmp.ne.s32.totalorder %s198, %s199
      %p208 = scmp.eq.s32.totalorder %s25, 0
      %p209 = por %p207, %p208
      %p210 = scmp.ne.s32.totalorder %s198, %s199
      %p211 = scmp.eq.s32.totalorder %s26, 2
      %p212 = por %p210, %p211
      %p214 = scmp.ne.s32.totalorder %s199, %s213
      %p215 = scmp.eq.s32.totalorder %s26, 0
      %p216 = por %p214, %p215
      %s218 = sadd.s32 %s217, 1
      %p221 = scmp.eq.s32.totalorder %s20, 2
      %p222 = scmp.ne.s32.totalorder %s217, %s219
      %p223 = scmp.eq.s32.totalorder %s20, 0
      %p224 = por %p222, %p223
      %p225 = scmp.ne.s32.totalorder %s217, %s219
      %p226 = scmp.eq.s32.totalorder %s25, 2
      %p227 = por %p225, %p226
      %p228 = scmp.ne.s32.totalorder %s219, %s220
      %p229 = scmp.eq.s32.totalorder %s25, 0
      %p230 = por %p228, %p229
      %p231 = scmp.ne.s32.totalorder %s219, %s220
      %p232 = scmp.eq.s32.totalorder %s26, 2
      %p233 = por %p231, %p232
      %p235 = scmp.ne.s32.totalorder %s220, %s234
      %p236 = scmp.eq.s32.totalorder %s26, 0
      %p237 = por %p235, %p236
      %s239 = sadd.s32 %s238, 1
      %p242 = scmp.eq.s32.totalorder %s20, 2
      %p243 = scmp.ne.s32.totalorder %s238, %s240
      %p244 = scmp.eq.s32.totalorder %s20, 0
      %p245 = por %p243, %p244
      %p246 = scmp.ne.s32.totalorder %s238, %s240
      %p247 = scmp.eq.s32.totalorder %s25, 2
      %p248 = por %p246, %p247
      %p249 = scmp.ne.s32.totalorder %s240, %s241
      %p250 = scmp.eq.s32.totalorder %s25, 0
      %p251 = por %p249, %p250
      %p252 = scmp.ne.s32.totalorder %s240, %s241
      %p253 = scmp.eq.s32.totalorder %s26, 2
      %p254 = por %p252, %p253
      %p256 = scmp.ne.s32.totalorder %s241, %s255
      %p257 = scmp.eq.s32.totalorder %s26, 0
      %p258 = por %p256, %p257
      %s260 = sadd.s32 %s259, 1
      %p263 = scmp.eq.s32.totalorder %s20, 2
      %p264 = scmp.ne.s32.totalorder %s259, %s261
      %p265 = scmp.eq.s32.totalorder %s20, 0
      %p266 = por %p264, %p265
      %p267 = scmp.ne.s32.totalorder %s259, %s261
      %p268 = scmp.eq.s32.totalorder %s25, 2
      %p269 = por %p267, %p268
      %p270 = scmp.ne.s32.totalorder %s261, %s262
      %p271 = scmp.eq.s32.totalorder %s25, 0
      %p272 = por %p270, %p271
      %p273 = scmp.ne.s32.totalorder %s261, %s262
      %p274 = scmp.eq.s32.totalorder %s26, 2
      %p275 = por %p273, %p274
      %p277 = scmp.ne.s32.totalorder %s262, %s276
      %p278 = scmp.eq.s32.totalorder %s26, 0
      %p279 = por %p277, %p278
      %p280 = scmp.le.s32.totalorder 1, %s20
      %p281 = scmp.lt.s32.totalorder %s20, 4
      %p282 = pnand %p280, %p281
      %p283 = pneg %p282
      // Predicated region
      $region9: #{tpu_custom_call.1} parent=5 // pred_check
        _
      $region10: #{tpu_custom_call.1} parent=5 // pred_check_branch
        %285 = sbr.rel (%p282) target = $region12
      $region11: #{tpu_custom_call.1} parent=5 // pred_region
        %s286 = ssub.s32 %s20, 1
        // Predicated region
        $region13: #{tpu_custom_call.1} parent=11 // pred_check
          %p287 = pneg %p41
        $region14: #{tpu_custom_call.1} parent=11 // pred_check_branch
          %289 = sbr.rel (%p287) target = $region16
        $region15: #{tpu_custom_call.1} parent=11 // pred_region
          _
        $region16: #{tpu_custom_call.1} parent=11 // pred_fallthru
          _
        // Predicated region
        $region17: #{tpu_custom_call.1} parent=11 // pred_check
          %p290 = pneg %p62
        $region18: #{tpu_custom_call.1} parent=11 // pred_check_branch
          %292 = sbr.rel (%p290) target = $region20
        $region19: #{tpu_custom_call.1} parent=11 // pred_region
          _
        $region20: #{tpu_custom_call.1} parent=11 // pred_fallthru
          _
        // Predicated region
        $region21: #{tpu_custom_call.1} parent=11 // pred_check
          %p293 = pneg %p83
        $region22: #{tpu_custom_call.1} parent=11 // pred_check_branch
          %295 = sbr.rel (%p293) target = $region24
        $region23: #{tpu_custom_call.1} parent=11 // pred_region
          _
        $region24: #{tpu_custom_call.1} parent=11 // pred_fallthru
          _
        // Predicated region
        $region25: #{tpu_custom_call.1} parent=11 // pred_check
          %p296 = pneg %p104
        $region26: #{tpu_custom_call.1} parent=11 // pred_check_branch
          %298 = sbr.rel (%p296) target = $region28
        $region27: #{tpu_custom_call.1} parent=11 // pred_region
          _
        $region28: #{tpu_custom_call.1} parent=11 // pred_fallthru
          _
        // Predicated region
        $region29: #{tpu_custom_call.1} parent=11 // pred_check
          %p299 = pneg %p125
        $region30: #{tpu_custom_call.1} parent=11 // pred_check_branch
          %301 = sbr.rel (%p299) target = $region32
        $region31: #{tpu_custom_call.1} parent=11 // pred_region
          _
        $region32: #{tpu_custom_call.1} parent=11 // pred_fallthru
          _
        // Predicated region
        $region33: #{tpu_custom_call.1} parent=11 // pred_check
          %p302 = pneg %p146
        $region34: #{tpu_custom_call.1} parent=11 // pred_check_branch
          %304 = sbr.rel (%p302) target = $region36
        $region35: #{tpu_custom_call.1} parent=11 // pred_region
          _
        $region36: #{tpu_custom_call.1} parent=11 // pred_fallthru
          _
        // Predicated region
        $region37: #{tpu_custom_call.1} parent=11 // pred_check
          %p305 = pneg %p167
        $region38: #{tpu_custom_call.1} parent=11 // pred_check_branch
          %307 = sbr.rel (%p305) target = $region40
        $region39: #{tpu_custom_call.1} parent=11 // pred_region
          _
        $region40: #{tpu_custom_call.1} parent=11 // pred_fallthru
          _
        // Predicated region
        $region41: #{tpu_custom_call.1} parent=11 // pred_check
          %p308 = pneg %p188
        $region42: #{tpu_custom_call.1} parent=11 // pred_check_branch
          %310 = sbr.rel (%p308) target = $region44
        $region43: #{tpu_custom_call.1} parent=11 // pred_region
          _
        $region44: #{tpu_custom_call.1} parent=11 // pred_fallthru
          _
        // Predicated region
        $region45: #{tpu_custom_call.1} parent=11 // pred_check
          %p311 = pneg %p209
        $region46: #{tpu_custom_call.1} parent=11 // pred_check_branch
          %313 = sbr.rel (%p311) target = $region48
        $region47: #{tpu_custom_call.1} parent=11 // pred_region
          _
        $region48: #{tpu_custom_call.1} parent=11 // pred_fallthru
          _
      $region12: #{tpu_custom_call.1} parent=5 // pred_fallthru
        _
      %p314 = scmp.lt.s32.totalorder %s20, 3
      // Predicated region
      $region49: #{tpu_custom_call.1} parent=5 // pred_check
        %p315 = pneg %p314
      $region50: #{tpu_custom_call.1} parent=5 // pred_check_branch
        %317 = sbr.rel (%p315) target = $region52
      $region51: #{tpu_custom_call.1} parent=5 // pred_region
        _
      $region52: #{tpu_custom_call.1} parent=5 // pred_fallthru
        _
      %p318 = scmp.le.s32.totalorder 1, %s20
      %p319 = scmp.lt.s32.totalorder %s20, 4
      %p320 = pnand %p318, %p319
      %p321 = pneg %p320
      // Predicated region
      $region53: #{tpu_custom_call.1} parent=5 // pred_check
        _
      $region54: #{tpu_custom_call.1} parent=5 // pred_check_branch
        %323 = sbr.rel (%p320) target = $region56
      $region55: #{tpu_custom_call.1} parent=5 // pred_region
        %s324 = ssub.s32 %s20, 1
        %p325 = pneg %p41
        %p326 = pneg %p38
        %p327 = pneg %p62
        %p328 = pneg %p59
        %p329 = pneg %p83
        %p330 = pneg %p80
        %p331 = pneg %p104
        %p332 = pneg %p101
        %p333 = pneg %p125
        %p334 = pneg %p122
        %p335 = pneg %p146
        %p336 = pneg %p143
        %p337 = pneg %p167
        %p338 = pneg %p164
        %p339 = pneg %p188
        %p340 = pneg %p185
        %p341 = pneg %p209
        %p342 = pneg %p206
        %p343 = pneg %p230
        %p344 = pneg %p227
        %p345 = pneg %p251
        %p346 = pneg %p248
        %p347 = pneg %p272
        %p348 = pneg %p269
        %p350 = scmp.eq.s32.totalorder %s25, 0
        // Predicated region
        $region57: #{tpu_custom_call.1} parent=55 // pred_check
          %p351 = pneg %p350
        $region58: #{tpu_custom_call.1} parent=55 // pred_check_branch
          %353 = sbr.rel (%p351) target = $region60
        $region59: #{tpu_custom_call.1} parent=55 // pred_region
          %v354 = vld [vmem:[%s3] sm:$0xff]
          %v355 = vld [vmem:[%s3 + $0x8] sm:$0xff]
          %v356 = vld [vmem:[%s3 + $0x10] sm:$0xff]
          %v357 = vpack.c.bf16 %v355, %v354
          %v358 = vpack.c.bf16 %v356, %v356
          %v359 = vld [vmem:[%s6] sm:$0xff]
          %v360 = vld [vmem:[%s6 + $0x8] sm:$0xff]
          %v361 = vld [vmem:[%s6 + $0x10] sm:$0xff]
          %v362 = vld [vmem:[%s0] sm:$0xff]
          %v363 = vld [vmem:[%s0 + $0x8] sm:$0xff]
          %v364 = vld [vmem:[%s0 + $0x10] sm:$0xff]
          %v365 = vld [vmem:[%s0 + $0x18] sm:$0xff]
          %v366 = vpack.c.bf16 %v364, %v362
          %v367 = vpack.c.bf16 %v365, %v363
          %369 = vset.pattern.permute.xlu0 0
          %370 = vperm.xlu0 %369, %v359
          %v371 = vpop.permute.xlu0 %370
          %374 = vset.pattern.permute.xlu0 0
          %375 = vperm.xlu0 %374, %v360
          %v376 = vpop.permute.xlu0 %375
          %379 = vset.pattern.permute.xlu0 0
          %380 = vperm.xlu0 %379, %v361
          %v381 = vpop.permute.xlu0 %380
          %vm383 = vcmask 130048
          %v385 = vsel %vm383, %v357, 0
          %v388 = vsel %vm383, %v358, 0
          %390 = vmatprep.subr.bf16.mxu0 %v367
          %391 = vmatpush1.bf16.msra.mxu0 %v366
          %392 = vmatprep.subr.bf16.mxu0 0
          %393 = vmatpush1.bf16.msra.mxu0 0
          %394 = vmatprep.subr.bf16.mxu0 0
          %395 = vmatpush1.bf16.msra.mxu0 0
          %396 = vmatprep.subr.bf16.mxu0 0
          %397 = vmatpush1.bf16.msra.mxu0 0
          %398 = vmatprep.subr.bf16.mxu0 0
          %399 = vmatpush1.bf16.msra.mxu0 0
          %400 = vmatprep.subr.bf16.mxu0 0
          %401 = vmatpush1.bf16.msra.mxu0 0
          %402 = vmatprep.subr.bf16.mxu0 0
          %403 = vmatpush1.bf16.msra.mxu0 0
          %404 = vmatprep.subr.bf16.mxu0 0
          %405 = vmatpush1.bf16.msra.mxu0 0
          %406 = vmatprep.subr.bf16.mxu0 0
          %407 = vmatpush1.bf16.msra.mxu0 0
          %408 = vmatprep.subr.bf16.mxu0 0
          %409 = vmatpush1.bf16.msra.mxu0 0
          %410 = vmatprep.subr.bf16.mxu0 0
          %411 = vmatpush1.bf16.msra.mxu0 0
          %412 = vmatprep.subr.bf16.mxu0 0
          %413 = vmatpush1.bf16.msra.mxu0 0
          %414 = vmatprep.subr.bf16.mxu0 0
          %415 = vmatpush1.bf16.msra.mxu0 0
          %416 = vmatprep.subr.bf16.mxu0 0
          %417 = vmatpush1.bf16.msra.mxu0 0
          %418 = vmatprep.subr.bf16.mxu0 0
          %419 = vmatpush1.bf16.msra.mxu0 0
          %420 = vmatprep.subr.bf16.mxu0 0
          %421 = vmatpush1.bf16.msra.mxu0 0
          %422 = vmatprep.mubr.bf16.mxu0 0
          %423 = vmatmul.mubr.bf16.gmra.mrb[0].mxu0 %v385
          %v424 = vpop.f32.mrb[0].mxu0
          %v425 = vadd.f32 %v371, %v424
          %v426 = vpop.f32.mrb[0].mxu0
          %v427 = vadd.f32 %v371, %v426
          %v428 = vpop.f32.mrb[0].mxu0
          %v429 = vadd.f32 %v376, %v428
          %v430 = vpop.f32.mrb[0].mxu0
          %v431 = vadd.f32 %v376, %v430
          %432 = vmatprep.mubr.bf16.mxu0 0
          %433 = vmatmul.mubr.bf16.gmra.mrb[0].mxu0 %v388
          %v434 = vpop.f32.mrb[0].mxu0
          %v435 = vadd.f32 %v381, %v434
          %v436 = vpop.f32.mrb[0].mxu0
          %v437 = vadd.f32 %v381, %v436
          %v438 = vpop.f32.mrb[0].mxu0
          %v439 = vpop.f32.mrb[0].mxu0
          %440 = vdwg.mxu0
          %v441 = vsub.f32 0.0, %v425
          %v442 = vsub.f32 0.0, %v427
          %v443 = vsub.f32 0.0, %v429
          %v444 = vsub.f32 0.0, %v431
          %v445 = vsub.f32 0.0, %v435
          %v446 = vsub.f32 0.0, %v437
          %v447 = vmul.f32 %v441, 1.442695
          %v448 = vpow.pop %v447
          %v449 = vmul.f32 %v442, 1.442695
          %v450 = vpow.pop %v449
          %v451 = vmul.f32 %v443, 1.442695
          %v452 = vpow.pop %v451
          %v453 = vmul.f32 %v444, 1.442695
          %v454 = vpow.pop %v453
          %v455 = vmul.f32 %v445, 1.442695
          %v456 = vpow.pop %v455
          %v457 = vmul.f32 %v446, 1.442695
          %v458 = vpow.pop %v457
          %v459 = vadd.f32 %v448, 1.0
          %v460 = vadd.f32 %v450, 1.0
          %v461 = vadd.f32 %v452, 1.0
          %v462 = vadd.f32 %v454, 1.0
          %v463 = vadd.f32 %v456, 1.0
          %v464 = vadd.f32 %v458, 1.0
          %v465 = vrcp.pop %v459
          %v466 = vrcp.pop %v460
          %v467 = vrcp.pop %v461
          %v468 = vrcp.pop %v462
          %v469 = vrcp.pop %v463
          %v470 = vrcp.pop %v464
          %471 = vst [vmem:[#allocation2] sm:$0xff] %v465
          %472 = vst [vmem:[#allocation2 + $0x8] sm:$0xff] %v466
          %473 = vst [vmem:[#allocation2 + $0x10] sm:$0xff] %v467
          %474 = vst [vmem:[#allocation2 + $0x18] sm:$0xff] %v468
          %475 = vst [vmem:[#allocation2 + $0x20] sm:$0xff] %v469
          %476 = vst [vmem:[#allocation2 + $0x28] sm:$0xff] %v470
          %s477 = scalar_lea.vmem %s0, 32
          %v478 = vld [vmem:[%s477] sm:$0xff]
          %v479 = vld [vmem:[%s477 + $0x8] sm:$0xff]
          %v480 = vld [vmem:[%s477 + $0x10] sm:$0xff]
          %v481 = vld [vmem:[%s477 + $0x18] sm:$0xff]
          %v482 = vpack.c.bf16 %v480, %v478
          %v483 = vpack.c.bf16 %v481, %v479
          %484 = vmatprep.subr.bf16.mxu0 %v483
          %485 = vmatpush1.bf16.msra.mxu0 %v482
          %486 = vmatprep.subr.bf16.mxu0 0
          %487 = vmatpush1.bf16.msra.mxu0 0
          %488 = vmatprep.subr.bf16.mxu0 0
          %489 = vmatpush1.bf16.msra.mxu0 0
          %490 = vmatprep.subr.bf16.mxu0 0
          %491 = vmatpush1.bf16.msra.mxu0 0
          %492 = vmatprep.subr.bf16.mxu0 0
          %493 = vmatpush1.bf16.msra.mxu0 0
          %494 = vmatprep.subr.bf16.mxu0 0
          %495 = vmatpush1.bf16.msra.mxu0 0
          %496 = vmatprep.subr.bf16.mxu0 0
          %497 = vmatpush1.bf16.msra.mxu0 0
          %498 = vmatprep.subr.bf16.mxu0 0
          %499 = vmatpush1.bf16.msra.mxu0 0
          %500 = vmatprep.subr.bf16.mxu0 0
          %501 = vmatpush1.bf16.msra.mxu0 0
          %502 = vmatprep.subr.bf16.mxu0 0
          %503 = vmatpush1.bf16.msra.mxu0 0
          %504 = vmatprep.subr.bf16.mxu0 0
          %505 = vmatpush1.bf16.msra.mxu0 0
          %506 = vmatprep.subr.bf16.mxu0 0
          %507 = vmatpush1.bf16.msra.mxu0 0
          %508 = vmatprep.subr.bf16.mxu0 0
          %509 = vmatpush1.bf16.msra.mxu0 0
          %510 = vmatprep.subr.bf16.mxu0 0
          %511 = vmatpush1.bf16.msra.mxu0 0
          %512 = vmatprep.subr.bf16.mxu0 0
          %513 = vmatpush1.bf16.msra.mxu0 0
          %514 = vmatprep.subr.bf16.mxu0 0
          %515 = vmatpush1.bf16.msra.mxu0 0
          %516 = vmatprep.mubr.bf16.mxu0 0
          %517 = vmatmul.mubr.bf16.gmra.mrb[0].mxu0 %v385
          %v518 = vpop.f32.mrb[0].mxu0
          %v519 = vadd.f32 %v371, %v518
          %v520 = vpop.f32.mrb[0].mxu0
          %v521 = vadd.f32 %v371, %v520
          %v522 = vpop.f32.mrb[0].mxu0
          %v523 = vadd.f32 %v376, %v522
          %v524 = vpop.f32.mrb[0].mxu0
          %v525 = vadd.f32 %v376, %v524
          %526 = vmatprep.mubr.bf16.mxu0 0
          %527 = vmatmul.mubr.bf16.gmra.mrb[0].mxu0 %v388
          %v528 = vpop.f32.mrb[0].mxu0
          %v529 = vadd.f32 %v381, %v528
          %v530 = vpop.f32.mrb[0].mxu0
          %v531 = vadd.f32 %v381, %v530
          %v532 = vpop.f32.mrb[0].mxu0
          %v533 = vpop.f32.mrb[0].mxu0
          %534 = vdwg.mxu0
          %v535 = vsub.f32 0.0, %v519
          %v536 = vsub.f32 0.0, %v521
          %v537 = vsub.f32 0.0, %v523
          %v538 = vsub.f32 0.0, %v525
          %v539 = vsub.f32 0.0, %v529
          %v540 = vsub.f32 0.0, %v531
          %v541 = vmul.f32 %v535, 1.442695
          %v542 = vpow.pop %v541
          %v543 = vmul.f32 %v536, 1.442695
          %v544 = vpow.pop %v543
          %v545 = vmul.f32 %v537, 1.442695
          %v546 = vpow.pop %v545
          %v547 = vmul.f32 %v538, 1.442695
          %v548 = vpow.pop %v547
          %v549 = vmul.f32 %v539, 1.442695
          %v550 = vpow.pop %v549
          %v551 = vmul.f32 %v540, 1.442695
          %v552 = vpow.pop %v551
          %v553 = vadd.f32 %v542, 1.0
          %v554 = vadd.f32 %v544, 1.0
          %v555 = vadd.f32 %v546, 1.0
          %v556 = vadd.f32 %v548, 1.0
          %v557 = vadd.f32 %v550, 1.0
          %v558 = vadd.f32 %v552, 1.0
          %v559 = vrcp.pop %v553
          %v560 = vrcp.pop %v554
          %v561 = vrcp.pop %v555
          %v562 = vrcp.pop %v556
          %v563 = vrcp.pop %v557
          %v564 = vrcp.pop %v558
          %s565 = scalar_lea.vmem [#allocation2], 48
          %566 = vst [vmem:[%s565] sm:$0xff] %v559
          %567 = vst [vmem:[%s565 + $0x8] sm:$0xff] %v560
          %568 = vst [vmem:[%s565 + $0x10] sm:$0xff] %v561
          %569 = vst [vmem:[%s565 + $0x18] sm:$0xff] %v562
          %570 = vst [vmem:[%s565 + $0x20] sm:$0xff] %v563
          %571 = vst [vmem:[%s565 + $0x28] sm:$0xff] %v564
        $region60: #{tpu_custom_call.1} parent=55 // pred_fallthru
          _
        %p572 = scmp.eq.s32.totalorder %s25, 1
        // Predicated region
        $region61: #{tpu_custom_call.1} parent=55 // pred_check
          %p573 = pneg %p572
        $region62: #{tpu_custom_call.1} parent=55 // pred_check_branch
          %575 = sbr.rel (%p573) target = $region64
        $region63: #{tpu_custom_call.1} parent=55 // pred_region
          %v576 = vld [vmem:[%s4] sm:$0xff]
          %v577 = vld [vmem:[%s4 + $0x8] sm:$0xff]
          %v578 = vld [vmem:[%s4 + $0x10] sm:$0xff]
          %v579 = vpack.c.bf16 %v577, %v576
          %v580 = vpack.c.bf16 %v578, %v578
          %v581 = vld [vmem:[%s7] sm:$0xff]
          %v582 = vld [vmem:[%s7 + $0x8] sm:$0xff]
          %v583 = vld [vmem:[%s7 + $0x10] sm:$0xff]
          %v584 = vld [vmem:[%s1] sm:$0xff]
          %v585 = vld [vmem:[%s1 + $0x8] sm:$0xff]
          %v586 = vld [vmem:[%s1 + $0x10] sm:$0xff]
          %v587 = vld [vmem:[%s1 + $0x18] sm:$0xff]
          %v588 = vpack.c.bf16 %v585, %v584
          %v589 = vpack.c.bf16 %v587, %v586
          %591 = vset.pattern.permute.xlu0 0
          %592 = vperm.xlu0 %591, %v581
          %v593 = vpop.permute.xlu0 %592
          %596 = vset.pattern.permute.xlu0 0
          %597 = vperm.xlu0 %596, %v582
          %v598 = vpop.permute.xlu0 %597
          %601 = vset.pattern.permute.xlu0 0
          %602 = vperm.xlu0 %601, %v583
          %v603 = vpop.permute.xlu0 %602
          %vm605 = vcmask 261120
          %v607 = vsel %vm605, %v579, 0
          %v610 = vsel %vm605, %v580, 0
          %612 = vmatprep.subr.bf16.mxu0 0
          %613 = vmatpush1.bf16.msra.mxu0 %v588
          %614 = vmatprep.subr.bf16.mxu0 0
          %615 = vmatpush1.bf16.msra.mxu0 %v589
          %616 = vmatprep.subr.bf16.mxu0 0
          %617 = vmatpush1.bf16.msra.mxu0 0
          %618 = vmatprep.subr.bf16.mxu0 0
          %619 = vmatpush1.bf16.msra.mxu0 0
          %620 = vmatprep.subr.bf16.mxu0 0
          %621 = vmatpush1.bf16.msra.mxu0 0
          %622 = vmatprep.subr.bf16.mxu0 0
          %623 = vmatpush1.bf16.msra.mxu0 0
          %624 = vmatprep.subr.bf16.mxu0 0
          %625 = vmatpush1.bf16.msra.mxu0 0
          %626 = vmatprep.subr.bf16.mxu0 0
          %627 = vmatpush1.bf16.msra.mxu0 0
          %628 = vmatprep.subr.bf16.mxu0 0
          %629 = vmatpush1.bf16.msra.mxu0 0
          %630 = vmatprep.subr.bf16.mxu0 0
          %631 = vmatpush1.bf16.msra.mxu0 0
          %632 = vmatprep.subr.bf16.mxu0 0
          %633 = vmatpush1.bf16.msra.mxu0 0
          %634 = vmatprep.subr.bf16.mxu0 0
          %635 = vmatpush1.bf16.msra.mxu0 0
          %636 = vmatprep.subr.bf16.mxu0 0
          %637 = vmatpush1.bf16.msra.mxu0 0
          %638 = vmatprep.subr.bf16.mxu0 0
          %639 = vmatpush1.bf16.msra.mxu0 0
          %640 = vmatprep.subr.bf16.mxu0 0
          %641 = vmatpush1.bf16.msra.mxu0 0
          %642 = vmatprep.subr.bf16.mxu0 0
          %643 = vmatpush1.bf16.msra.mxu0 0
          %644 = vmatprep.mubr.bf16.mxu0 0
          %645 = vmatmul.mubr.bf16.gmra.mrb[0].mxu0 %v607
          %v646 = vpop.f32.mrb[0].mxu0
          %v647 = vadd.f32 %v593, %v646
          %v648 = vpop.f32.mrb[0].mxu0
          %v649 = vpop.f32.mrb[0].mxu0
          %v650 = vadd.f32 %v598, %v649
          %v651 = vpop.f32.mrb[0].mxu0
          %652 = vmatprep.mubr.bf16.mxu0 0
          %653 = vmatmul.mubr.bf16.gmra.mrb[0].mxu0 %v610
          %v654 = vpop.f32.mrb[0].mxu0
          %v655 = vadd.f32 %v603, %v654
          %v656 = vpop.f32.mrb[0].mxu0
          %v657 = vpop.f32.mrb[0].mxu0
          %v658 = vpop.f32.mrb[0].mxu0
          %659 = vdwg.mxu0
          %v660 = vsub.f32 0.0, %v647
          %v661 = vsub.f32 0.0, %v650
          %v662 = vsub.f32 0.0, %v655
          %v663 = vmul.f32 %v660, 1.442695
          %v664 = vpow.pop %v663
          %v665 = vmul.f32 %v661, 1.442695
          %v666 = vpow.pop %v665
          %v667 = vmul.f32 %v662, 1.442695
          %v668 = vpow.pop %v667
          %v669 = vadd.f32 %v664, 1.0
          %v670 = vadd.f32 %v666, 1.0
          %v671 = vadd.f32 %v668, 1.0
          %v672 = vrcp.pop %v669
          %v673 = vrcp.pop %v670
          %v674 = vrcp.pop %v671
          %vm675 = vcmask 523264
          %676 = vst.msk [vmem:[#allocation4] sm:$0xff] %vm675, %v672
          %677 = vst.msk [vmem:[#allocation4 + $0x8] sm:$0xff] %vm675, %v673
          %678 = vst.msk [vmem:[#allocation4 + $0x10] sm:$0xff] %vm675, %v674
          %s679 = scalar_lea.vmem %s1, 32
          %v680 = vld [vmem:[%s679] sm:$0xff]
          %v681 = vld [vmem:[%s679 + $0x8] sm:$0xff]
          %v682 = vld [vmem:[%s679 + $0x10] sm:$0xff]
          %v683 = vld [vmem:[%s679 + $0x18] sm:$0xff]
          %v684 = vpack.c.bf16 %v681, %v680
          %v685 = vpack.c.bf16 %v683, %v682
          %686 = vmatprep.subr.bf16.mxu0 0
          %687 = vmatpush1.bf16.msra.mxu0 %v684
          %688 = vmatprep.subr.bf16.mxu0 0
          %689 = vmatpush1.bf16.msra.mxu0 %v685
          %690 = vmatprep.subr.bf16.mxu0 0
          %691 = vmatpush1.bf16.msra.mxu0 0
          %692 = vmatprep.subr.bf16.mxu0 0
          %693 = vmatpush1.bf16.msra.mxu0 0
          %694 = vmatprep.subr.bf16.mxu0 0
          %695 = vmatpush1.bf16.msra.mxu0 0
          %696 = vmatprep.subr.bf16.mxu0 0
          %697 = vmatpush1.bf16.msra.mxu0 0
          %698 = vmatprep.subr.bf16.mxu0 0
          %699 = vmatpush1.bf16.msra.mxu0 0
          %700 = vmatprep.subr.bf16.mxu0 0
          %701 = vmatpush1.bf16.msra.mxu0 0
          %702 = vmatprep.subr.bf16.mxu0 0
          %703 = vmatpush1.bf16.msra.mxu0 0
          %704 = vmatprep.subr.bf16.mxu0 0
          %705 = vmatpush1.bf16.msra.mxu0 0
          %706 = vmatprep.subr.bf16.mxu0 0
          %707 = vmatpush1.bf16.msra.mxu0 0
          %708 = vmatprep.subr.bf16.mxu0 0
          %709 = vmatpush1.bf16.msra.mxu0 0
          %710 = vmatprep.subr.bf16.mxu0 0
          %711 = vmatpush1.bf16.msra.mxu0 0
          %712 = vmatprep.subr.bf16.mxu0 0
          %713 = vmatpush1.bf16.msra.mxu0 0
          %714 = vmatprep.subr.bf16.mxu0 0
          %715 = vmatpush1.bf16.msra.mxu0 0
          %716 = vmatprep.subr.bf16.mxu0 0
          %717 = vmatpush1.bf16.msra.mxu0 0
          %718 = vmatprep.mubr.bf16.mxu0 0
          %719 = vmatmul.mubr.bf16.gmra.mrb[0].mxu0 %v607
          %v720 = vpop.f32.mrb[0].mxu0
          %v721 = vadd.f32 %v593, %v720
          %v722 = vpop.f32.mrb[0].mxu0
          %v723 = vpop.f32.mrb[0].mxu0
          %v724 = vadd.f32 %v598, %v723
          %v725 = vpop.f32.mrb[0].mxu0
          %726 = vmatprep.mubr.bf16.mxu0 0
          %727 = vmatmul.mubr.bf16.gmra.mrb[0].mxu0 %v610
          %v728 = vpop.f32.mrb[0].mxu0
          %v729 = vadd.f32 %v603, %v728
          %v730 = vpop.f32.mrb[0].mxu0
          %v731 = vpop.f32.mrb[0].mxu0
          %v732 = vpop.f32.mrb[0].mxu0
          %733 = vdwg.mxu0
          %v734 = vsub.f32 0.0, %v721
          %v735 = vsub.f32 0.0, %v724
          %v736 = vsub.f32 0.0, %v729
          %v737 = vmul.f32 %v734, 1.442695
          %v738 = vpow.pop %v737
          %v739 = vmul.f32 %v735, 1.442695
          %v740 = vpow.pop %v739
          %v741 = vmul.f32 %v736, 1.442695
          %v742 = vpow.pop %v741
          %v743 = vadd.f32 %v738, 1.0
          %v744 = vadd.f32 %v740, 1.0
          %v745 = vadd.f32 %v742, 1.0
          %v746 = vrcp.pop %v743
          %v747 = vrcp.pop %v744
          %v748 = vrcp.pop %v745
          %s749 = scalar_lea.vmem [#allocation4], 24
          %750 = vst.msk [vmem:[%s749] sm:$0xff] %vm675, %v746
          %751 = vst.msk [vmem:[%s749 + $0x8] sm:$0xff] %vm675, %v747
          %752 = vst.msk [vmem:[%s749 + $0x10] sm:$0xff] %vm675, %v748
        $region64: #{tpu_custom_call.1} parent=55 // pred_fallthru
          _
        %p753 = scmp.eq.s32.totalorder %s25, 2
        // Predicated region
        $region65: #{tpu_custom_call.1} parent=55 // pred_check
          %p754 = pneg %p753
        $region66: #{tpu_custom_call.1} parent=55 // pred_check_branch
          %756 = sbr.rel (%p754) target = $region68
        $region67: #{tpu_custom_call.1} parent=55 // pred_region
          %v757 = vld [vmem:[%s5] sm:$0xff]
          %v758 = vld [vmem:[%s5 + $0x8] sm:$0xff]
          %v759 = vld [vmem:[%s5 + $0x10] sm:$0xff]
          %v760 = vpack.c.bf16 %v758, %v757
          %v761 = vpack.c.bf16 %v759, %v759
          %v762 = vld [vmem:[%s8] sm:$0xff]
          %v763 = vld [vmem:[%s8 + $0x8] sm:$0xff]
          %v764 = vld [vmem:[%s8 + $0x10] sm:$0xff]
          %v765 = vld [vmem:[%s2] sm:$0xff]
          %v766 = vld [vmem:[%s2 + $0x8] sm:$0xff]
          %v767 = vld [vmem:[%s2 + $0x10] sm:$0xff]
          %v768 = vld [vmem:[%s2 + $0x18] sm:$0xff]
          %v769 = vld [vmem:[%s2 + $0x20] sm:$0xff]
          %v770 = vld [vmem:[%s2 + $0x28] sm:$0xff]
          %v771 = vld [vmem:[%s2 + $0x30] sm:$0xff]
          %v772 = vld [vmem:[%s2 + $0x38] sm:$0xff]
          %v773 = vpack.c.bf16 %v766, %v765
          %v774 = vpack.c.bf16 %v768, %v767
          %v775 = vpack.c.bf16 %v770, %v769
          %v776 = vpack.c.bf16 %v772, %v771
          %778 = vset.pattern.permute.xlu0 0
          %779 = vperm.xlu0 %778, %v762
          %v780 = vpop.permute.xlu0 %779
          %783 = vset.pattern.permute.xlu0 0
          %784 = vperm.xlu0 %783, %v763
          %v785 = vpop.permute.xlu0 %784
          %788 = vset.pattern.permute.xlu0 0
          %789 = vperm.xlu0 %788, %v764
          %v790 = vpop.permute.xlu0 %789
          %vm792 = vcmask 523264
          %v794 = vsel %vm792, %v760, 0
          %v797 = vsel %vm792, %v761, 0
          %799 = vmatprep.subr.bf16.mxu0 0
          %800 = vmatpush1.bf16.msra.mxu0 %v773
          %801 = vmatprep.subr.bf16.mxu0 0
          %802 = vmatpush1.bf16.msra.mxu0 %v774
          %803 = vmatprep.subr.bf16.mxu0 0
          %804 = vmatpush1.bf16.msra.mxu0 %v775
          %805 = vmatprep.subr.bf16.mxu0 0
          %806 = vmatpush1.bf16.msra.mxu0 %v776
          %807 = vmatprep.subr.bf16.mxu0 0
          %808 = vmatpush1.bf16.msra.mxu0 0
          %809 = vmatprep.subr.bf16.mxu0 0
          %810 = vmatpush1.bf16.msra.mxu0 0
          %811 = vmatprep.subr.bf16.mxu0 0
          %812 = vmatpush1.bf16.msra.mxu0 0
          %813 = vmatprep.subr.bf16.mxu0 0
          %814 = vmatpush1.bf16.msra.mxu0 0
          %815 = vmatprep.subr.bf16.mxu0 0
          %816 = vmatpush1.bf16.msra.mxu0 0
          %817 = vmatprep.subr.bf16.mxu0 0
          %818 = vmatpush1.bf16.msra.mxu0 0
          %819 = vmatprep.subr.bf16.mxu0 0
          %820 = vmatpush1.bf16.msra.mxu0 0
          %821 = vmatprep.subr.bf16.mxu0 0
          %822 = vmatpush1.bf16.msra.mxu0 0
          %823 = vmatprep.subr.bf16.mxu0 0
          %824 = vmatpush1.bf16.msra.mxu0 0
          %825 = vmatprep.subr.bf16.mxu0 0
          %826 = vmatpush1.bf16.msra.mxu0 0
          %827 = vmatprep.subr.bf16.mxu0 0
          %828 = vmatpush1.bf16.msra.mxu0 0
          %829 = vmatprep.subr.bf16.mxu0 0
          %830 = vmatpush1.bf16.msra.mxu0 0
          %831 = vmatprep.mubr.bf16.mxu0 0
          %832 = vmatmul.mubr.bf16.gmra.mrb[0].mxu0 %v794
          %v833 = vpop.f32.mrb[0].mxu0
          %v834 = vadd.f32 %v780, %v833
          %v835 = vpop.f32.mrb[0].mxu0
          %v836 = vpop.f32.mrb[0].mxu0
          %v837 = vadd.f32 %v785, %v836
          %v838 = vpop.f32.mrb[0].mxu0
          %839 = vmatprep.mubr.bf16.mxu0 0
          %840 = vmatmul.mubr.bf16.gmra.mrb[0].mxu0 %v797
          %v841 = vpop.f32.mrb[0].mxu0
          %v842 = vadd.f32 %v790, %v841
          %v843 = vpop.f32.mrb[0].mxu0
          %v844 = vpop.f32.mrb[0].mxu0
          %v845 = vpop.f32.mrb[0].mxu0
          %846 = vdwg.mxu0
          %v847 = vsub.f32 0.0, %v834
          %v848 = vsub.f32 0.0, %v837
          %v849 = vsub.f32 0.0, %v842
          %v850 = vmul.f32 %v847, 1.442695
          %v851 = vpow.pop %v850
          %v852 = vmul.f32 %v848, 1.442695
          %v853 = vpow.pop %v852
          %v854 = vmul.f32 %v849, 1.442695
          %v855 = vpow.pop %v854
          %v856 = vadd.f32 %v851, 1.0
          %v857 = vadd.f32 %v853, 1.0
          %v858 = vadd.f32 %v855, 1.0
          %v859 = vrcp.pop %v856
          %v860 = vrcp.pop %v857
          %v861 = vrcp.pop %v858
          %vm862 = vcmask 130048
          %863 = vst.msk [vmem:[%s11] sm:$0xff] %vm862, %v859
          %864 = vst.msk [vmem:[%s11 + $0x8] sm:$0xff] %vm862, %v860
          %865 = vst.msk [vmem:[%s11 + $0x10] sm:$0xff] %vm862, %v861
          %s866 = scalar_lea.vmem %s2, 64
          %v867 = vld [vmem:[%s866] sm:$0xff]
          %v868 = vld [vmem:[%s866 + $0x8] sm:$0xff]
          %v869 = vld [vmem:[%s866 + $0x10] sm:$0xff]
          %v870 = vld [vmem:[%s866 + $0x18] sm:$0xff]
          %v871 = vld [vmem:[%s866 + $0x20] sm:$0xff]
          %v872 = vld [vmem:[%s866 + $0x28] sm:$0xff]
          %v873 = vld [vmem:[%s866 + $0x30] sm:$0xff]
          %v874 = vld [vmem:[%s866 + $0x38] sm:$0xff]
          %v875 = vpack.c.bf16 %v868, %v867
          %v876 = vpack.c.bf16 %v870, %v869
          %v877 = vpack.c.bf16 %v872, %v871
          %v878 = vpack.c.bf16 %v874, %v873
          %879 = vmatprep.subr.bf16.mxu0 0
          %880 = vmatpush1.bf16.msra.mxu0 %v875
          %881 = vmatprep.subr.bf16.mxu0 0
          %882 = vmatpush1.bf16.msra.mxu0 %v876
          %883 = vmatprep.subr.bf16.mxu0 0
          %884 = vmatpush1.bf16.msra.mxu0 %v877
          %885 = vmatprep.subr.bf16.mxu0 0
          %886 = vmatpush1.bf16.msra.mxu0 %v878
          %887 = vmatprep.subr.bf16.mxu0 0
          %888 = vmatpush1.bf16.msra.mxu0 0
          %889 = vmatprep.subr.bf16.mxu0 0
          %890 = vmatpush1.bf16.msra.mxu0 0
          %891 = vmatprep.subr.bf16.mxu0 0
          %892 = vmatpush1.bf16.msra.mxu0 0
          %893 = vmatprep.subr.bf16.mxu0 0
          %894 = vmatpush1.bf16.msra.mxu0 0
          %895 = vmatprep.subr.bf16.mxu0 0
          %896 = vmatpush1.bf16.msra.mxu0 0
          %897 = vmatprep.subr.bf16.mxu0 0
          %898 = vmatpush1.bf16.msra.mxu0 0
          %899 = vmatprep.subr.bf16.mxu0 0
          %900 = vmatpush1.bf16.msra.mxu0 0
          %901 = vmatprep.subr.bf16.mxu0 0
          %902 = vmatpush1.bf16.msra.mxu0 0
          %903 = vmatprep.subr.bf16.mxu0 0
          %904 = vmatpush1.bf16.msra.mxu0 0
          %905 = vmatprep.subr.bf16.mxu0 0
          %906 = vmatpush1.bf16.msra.mxu0 0
          %907 = vmatprep.subr.bf16.mxu0 0
          %908 = vmatpush1.bf16.msra.mxu0 0
          %909 = vmatprep.subr.bf16.mxu0 0
          %910 = vmatpush1.bf16.msra.mxu0 0
          %911 = vmatprep.mubr.bf16.mxu0 0
          %912 = vmatmul.mubr.bf16.gmra.mrb[0].mxu0 %v794
          %v913 = vpop.f32.mrb[0].mxu0
          %v914 = vadd.f32 %v780, %v913
          %v915 = vpop.f32.mrb[0].mxu0
          %v916 = vpop.f32.mrb[0].mxu0
          %v917 = vadd.f32 %v785, %v916
          %v918 = vpop.f32.mrb[0].mxu0
          %919 = vmatprep.mubr.bf16.mxu0 0
          %920 = vmatmul.mubr.bf16.gmra.mrb[0].mxu0 %v797
          %v921 = vpop.f32.mrb[0].mxu0
          %v922 = vadd.f32 %v790, %v921
          %v923 = vpop.f32.mrb[0].mxu0
          %v924 = vpop.f32.mrb[0].mxu0
          %v925 = vpop.f32.mrb[0].mxu0
          %926 = vdwg.mxu0
          %v927 = vsub.f32 0.0, %v914
          %v928 = vsub.f32 0.0, %v917
          %v929 = vsub.f32 0.0, %v922
          %v930 = vmul.f32 %v927, 1.442695
          %v931 = vpow.pop %v930
          %v932 = vmul.f32 %v928, 1.442695
          %v933 = vpow.pop %v932
          %v934 = vmul.f32 %v929, 1.442695
          %v935 = vpow.pop %v934
          %v936 = vadd.f32 %v931, 1.0
          %v937 = vadd.f32 %v933, 1.0
          %v938 = vadd.f32 %v935, 1.0
          %v939 = vrcp.pop %v936
          %v940 = vrcp.pop %v937
          %v941 = vrcp.pop %v938
          %s942 = scalar_lea.vmem %s11, 24
          %943 = vst.msk [vmem:[%s942] sm:$0xff] %vm862, %v939
          %944 = vst.msk [vmem:[%s942 + $0x8] sm:$0xff] %vm862, %v940
          %945 = vst.msk [vmem:[%s942 + $0x10] sm:$0xff] %vm862, %v941
        $region68: #{tpu_custom_call.1} parent=55 // pred_fallthru
          _
        // Predicated region
        $region69: #{tpu_custom_call.1} parent=55 // pred_check
          %p946 = pneg %p227
        $region70: #{tpu_custom_call.1} parent=55 // pred_check_branch
          %948 = sbr.rel (%p946) target = $region72
        $region71: #{tpu_custom_call.1} parent=55 // pred_region
          %s950 = ssub.s32 1536, 1536
          %951 = vsyncadd [#allocation3], %s950
          %s952 = sshll.u32 [#allocation2], 4
          %s953 = int_to_ptr.vmem [resolvable:$true] %s952
          %958 = dma.vmem_to_hbm [thread:$0]  %s953, 1536, %s9, [#allocation3], 256, 256, 16
        $region72: #{tpu_custom_call.1} parent=55 // pred_fallthru
          _
        // Predicated region
        $region73: #{tpu_custom_call.1} parent=55 // pred_check
          %p959 = pneg %p248
        $region74: #{tpu_custom_call.1} parent=55 // pred_check_branch
          %961 = sbr.rel (%p959) target = $region76
        $region75: #{tpu_custom_call.1} parent=55 // pred_region
          %s963 = ssub.s32 768, 768
          %964 = vsyncadd [#allocation5], %s963
          %s965 = sshll.u32 [#allocation4], 4
          %s966 = int_to_ptr.vmem [resolvable:$true] %s965
          %971 = dma.vmem_to_hbm [thread:$0]  %s966, 768, %s10, [#allocation5], 128, 128, 8
        $region76: #{tpu_custom_call.1} parent=55 // pred_fallthru
          _
        // Predicated region
        $region77: #{tpu_custom_call.1} parent=55 // pred_check
          %p972 = pneg %p269
        $region78: #{tpu_custom_call.1} parent=55 // pred_check_branch
          %974 = sbr.rel (%p972) target = $region80
        $region79: #{tpu_custom_call.1} parent=55 // pred_region
          _
        $region80: #{tpu_custom_call.1} parent=55 // pred_fallthru
          _
        // Predicated region
        $region81: #{tpu_custom_call.1} parent=55 // pred_check
          %p975 = pneg %p227
        $region82: #{tpu_custom_call.1} parent=55 // pred_check_branch
          %977 = sbr.rel (%p975) target = $region84
        $region83: #{tpu_custom_call.1} parent=55 // pred_region
          %978 = dma.done [#allocation3], 1536
        $region84: #{tpu_custom_call.1} parent=55 // pred_fallthru
          _
        // Predicated region
        $region85: #{tpu_custom_call.1} parent=55 // pred_check
          %p979 = pneg %p248
        $region86: #{tpu_custom_call.1} parent=55 // pred_check_branch
          %981 = sbr.rel (%p979) target = $region88
        $region87: #{tpu_custom_call.1} parent=55 // pred_region
          %982 = dma.done [#allocation5], 768
        $region88: #{tpu_custom_call.1} parent=55 // pred_fallthru
          _
        // Predicated region
        $region89: #{tpu_custom_call.1} parent=55 // pred_check
          %p983 = pneg %p269
        $region90: #{tpu_custom_call.1} parent=55 // pred_check_branch
          %985 = sbr.rel (%p983) target = $region92
        $region91: #{tpu_custom_call.1} parent=55 // pred_region
          _
        $region92: #{tpu_custom_call.1} parent=55 // pred_fallthru
          _
      $region56: #{tpu_custom_call.1} parent=5 // pred_fallthru
        _
      %p986 = scmp.le.s32.totalorder 2, %s20
      // Predicated region
      $region93: #{tpu_custom_call.1} parent=5 // pred_check
        %p987 = pneg %p986
      $region94: #{tpu_custom_call.1} parent=5 // pred_check_branch
        %989 = sbr.rel (%p987) target = $region96
      $region95: #{tpu_custom_call.1} parent=5 // pred_region
        %s990 = ssub.s32 %s20, 2
      $region96: #{tpu_custom_call.1} parent=5 // pred_fallthru
        _
    $region6: #{tpu_custom_call.1} parent=1 // loop_footer
      %s24 = sadd.s32 1, %s20
    $region7: #{tpu_custom_call.1} parent=1 // loop_footer_branch
      %19 = sbr.rel target = $region3
    $region8: #{tpu_custom_call.1} parent=1 // loop_exit
      _
    %991 = vsyncpa [#allocation3], 1
    %s992 = scalar_lea.sflag [#allocation3], 1
    %993 = vsyncpa %s992, 1
    %994 = vsyncpa [#allocation5], 1

</llo_original>
